<compile_context>
chip_gen: v6e
topology: v6e:2x2x1
jax: 0.10.0
libtpu: 0.0.40
codegen_flags: <defaults>
</compile_context>

<pallas_src>
import functools

import jax
import jax.numpy as jnp
from jax.experimental import pallas as pl
from jax.experimental.pallas import tpu as pltpu


def _round_up(n: int, m: int) -> int:
    return ((n + m - 1) // m) * m


def _mlp_kernel(x_ref, w1_ref, b1_ref, w2_ref, b2_ref, w3_ref, b3_ref, o_ref):
    # One batch tile per grid step; weights/biases are VMEM-resident across steps.
    x = x_ref[...]
    if x.dtype != jnp.bfloat16:
        x = x.astype(jnp.bfloat16)

    # layer 1: Linear(in -> hid) + ReLU   (bf16 MXU operands, f32 accumulate/bias/ReLU)
    h1 = jnp.dot(x, w1_ref[...], preferred_element_type=jnp.float32)
    h1 = jnp.maximum(h1 + b1_ref[...], 0.0)

    # layer 2: Linear(hid -> hid) + ReLU
    h2 = jnp.dot(h1.astype(jnp.bfloat16), w2_ref[...], preferred_element_type=jnp.float32)
    h2 = jnp.maximum(h2 + b2_ref[...], 0.0)

    # layer 3: Linear(hid -> out), no activation
    out = jnp.dot(h2.astype(jnp.bfloat16), w3_ref[...], preferred_element_type=jnp.float32)
    o_ref[...] = (out + b3_ref[...]).astype(o_ref.dtype)


def _vmem_capacity_bytes() -> int:
    try:
        return int(pltpu.get_tpu_info().vmem_capacity_bytes)
    except Exception:
        return 64 << 20  # conservative (v7x-sized) fallback


def _vmem_bytes_estimate(tile_b, in_dim, hid_dim, out_dim, weight_buffers):
    """Honest in-kernel VMEM footprint (Mosaic pads last dims to 128 lanes / 8 sublanes)."""
    f32, bf16 = 4, 2
    r8 = lambda n: _round_up(n, 8)
    r128 = lambda n: _round_up(n, 128)
    tb, hid, inp, outp = r8(tile_b), r128(hid_dim), r128(in_dim), r128(out_dim)
    weights = weight_buffers * bf16 * (r8(in_dim) * hid + r8(hid_dim) * hid + r8(hid_dim) * outp)
    biases = 2 * f32 * 8 * (2 * hid + outp)            # (1,d) pads to (8,d); double-buffered
    io = 2 * tb * (inp * bf16 + outp * f32)            # double-buffered x / out tiles
    inter = tb * hid * (2 * f32 + 2 * bf16)            # h1,h2 (f32) + their bf16 MXU copies
    return weights + biases + io + inter


def _choose_tile_b(batch, in_dim, hid_dim, out_dim, resident_weight_bytes, vmem_cap):
    if batch <= 8:
        return batch                                   # single full-extent block (exempt)
    f32, bf16 = 4, 2
    r128 = lambda n: _round_up(n, 128)
    row_bytes = (2 * r128(in_dim) * bf16 + 2 * r128(out_dim) * f32
                 + r128(hid_dim) * (2 * f32 + 2 * bf16))
    budget = max(1 << 20, int(0.7 * vmem_cap) - resident_weight_bytes)
    cap = 1024 if vmem_cap >= (96 << 20) else 512      # v5e/v6e (128 MiB) vs v7x (64 MiB)
    # >= 2 grid steps when the batch allows it: feeds both v7x TensorCores + pipelining.
    tile = min(cap, budget // row_bytes, _round_up(batch, 8) // 2)
    return max(8, (tile // 8) * 8)


def _resident_spec(shape, single_buffer):
    ndim = len(shape)
    if single_buffer:
        # Constant index_map => the block never changes, so one buffer suffices. Halves the
        # resident-weight VMEM footprint (matters on v7x's 64 MiB VMEM at large hid).
        return pl.BlockSpec(shape, lambda i: (0,) * ndim, pipeline_mode=pl.Buffered(1))
    return pl.BlockSpec(shape, lambda i: (0,) * ndim)


@functools.partial(jax.jit, static_argnames=("out_dtype",))
def mlp_forward(x, params, out_dtype=jnp.float32):
    """Fused MLP forward.

    x: (batch, in_dim); pass bfloat16 to halve activation DMA (float32 also accepted).
    params: output of prepare_params() — bf16 (in, out) weights, f32 (1, out) biases.
    """
    w1, b1, w2, b2, w3, b3 = (params[k] for k in ("w1", "b1", "w2", "b2", "w3", "b3"))
    batch, in_dim = x.shape
    hid_dim = w1.shape[1]
    out_dim = w3.shape[1]

    weight_bytes = 2 * (in_dim * hid_dim + hid_dim * hid_dim + hid_dim * out_dim)
    single_buffer = weight_bytes > (8 << 20)           # only bother when weights are big
    weight_buffers = 1 if single_buffer else 2

    vmem_cap = _vmem_capacity_bytes()
    tile_b = _choose_tile_b(batch, in_dim, hid_dim, out_dim,
                            weight_buffers * weight_bytes, vmem_cap)
    grid_b = pl.cdiv(batch, tile_b)                    # ragged last tile is fine (rows independent)

    est = _vmem_bytes_estimate(tile_b, in_dim, hid_dim, out_dim, weight_buffers)
    vmem_limit = min(int(0.85 * vmem_cap), max(16 << 20, int(1.3 * est)))
    # TODO(synk): add a weight-streaming fallback (grid over hid/out blocks + f32 accumulator
    # scratch, reduction axis "arbitrary") for hidden sizes whose bf16 weights no longer fit
    # in VMEM (e.g. hid >= ~5000 on v7x's 64 MiB, hid >= ~8000 on v5e/v6e).

    flops = 2 * batch * (in_dim * hid_dim + hid_dim * hid_dim + hid_dim * out_dim)
    bytes_accessed = (x.size * x.dtype.itemsize
                      + (w1.size + w2.size + w3.size) * 2
                      + (b1.size + b2.size + b3.size) * 4
                      + batch * out_dim * jnp.dtype(out_dtype).itemsize)

    return pl.pallas_call(
        _mlp_kernel,
        out_shape=jax.ShapeDtypeStruct((batch, out_dim), out_dtype),
        grid_spec=pltpu.PrefetchScalarGridSpec(
            num_scalar_prefetch=0,
            grid=(grid_b,),
            in_specs=[
                pl.BlockSpec((tile_b, in_dim), lambda i: (i, 0)),   # x: tiled over batch only
                _resident_spec(w1.shape, single_buffer), _resident_spec(b1.shape, False),
                _resident_spec(w2.shape, single_buffer), _resident_spec(b2.shape, False),
                _resident_spec(w3.shape, single_buffer), _resident_spec(b3.shape, False),
            ],
            out_specs=pl.BlockSpec((tile_b, out_dim), lambda i: (i, 0)),
        ),
        compiler_params=pltpu.CompilerParams(
            dimension_semantics=("parallel",),
            vmem_limit_bytes=vmem_limit,
        ),
        cost_estimate=pl.CostEstimate(
            flops=flops, transcendentals=0, bytes_accessed=bytes_accessed
        ),
    )(x, w1, b1, w2, b2, w3, b3)


def init_mlp_params(key, in_dim, hid_dim, out_dim):
    """nn.Linear-style U(-1/sqrt(fan_in), 1/sqrt(fan_in)) init; weights stored (in, out)."""
    ks = jax.random.split(key, 6)

    def linear(kw, kb, fan_in, fan_out):
        bound = 1.0 / jnp.sqrt(jnp.float32(fan_in))
        w = jax.random.uniform(kw, (fan_in, fan_out), jnp.float32, -bound, bound)
        b = jax.random.uniform(kb, (fan_out,), jnp.float32, -bound, bound)
        return w, b

    w1, b1 = linear(ks[0], ks[1], in_dim, hid_dim)
    w2, b2 = linear(ks[2], ks[3], hid_dim, hid_dim)
    w3, b3 = linear(ks[4], ks[5], hid_dim, out_dim)
    return {"w1": w1, "b1": b1, "w2": w2, "b2": b2, "w3": w3, "b3": b3}


def prepare_params(params):
    """One-time (outside jit) weight prep: bf16 weights for the MXU, f32 (1, dim) biases.
    Doing this once removes a per-call HBM pad/cast pass over every weight matrix."""
    prep = {}
    for i in (1, 2, 3):
        prep[f"w{i}"] = jnp.asarray(params[f"w{i}"], jnp.bfloat16)
        prep[f"b{i}"] = jnp.asarray(params[f"b{i}"], jnp.float32).reshape(1, -1)
    return prep


def _ref_forward(x, params, cast_bf16):
    def lin(h, w, b):
        if cast_bf16:
            h = h.astype(jnp.bfloat16)
            w = w.astype(jnp.bfloat16)
        return jnp.dot(h, w, preferred_element_type=jnp.float32) + b.reshape(1, -1)

    h = jnp.maximum(lin(x, params["w1"], params["b1"]), 0.0)
    h = jnp.maximum(lin(h, params["w2"], params["b2"]), 0.0)
    return lin(h, params["w3"], params["b3"])


if __name__ == "__main__":
    key = jax.random.PRNGKey(0)
    k_x, k_p = jax.random.split(key)

    batch, in_dim, hid_dim, out_dim = 8, 16, 32, 8
    x = jax.random.normal(k_x, (batch, in_dim), jnp.float32)
    params = init_mlp_params(k_p, in_dim, hid_dim, out_dim)
    prep = prepare_params(params)                     # one-time: bf16 weights, (1,d) f32 biases

    xb = x.astype(jnp.bfloat16)                       # stream activations in bf16
    out = mlp_forward(xb, prep)
    jax.block_until_ready(out)
    assert out.shape == (batch, out_dim)
    assert out.dtype == jnp.float32

    # Reference with identical mixed precision (bf16 x / weights / intermediates, f32 accumulate).
    ref_bf16 = _ref_forward(xb.astype(jnp.float32), params, cast_bf16=True)
    assert jnp.allclose(out, ref_bf16, atol=1e-4, rtol=1e-4), "mismatch vs bf16 reference"

    # Looser check against pure-f32 PyTorch-equivalent math (bf16 operand rounding only).
    ref_f32 = _ref_forward(x, params, cast_bf16=False)
    assert jnp.allclose(out, ref_f32, atol=5e-2, rtol=5e-2), "mismatch vs f32 reference"

    print("KERNEL_OK")
</pallas_src>

<mosaic_0001>
module attributes {stable_mosaic.version = 11 : i64} {
  func.func @_mlp_kernel(%arg0: i32, %arg1: memref<8x16xbf16, #tpu.memory_space<vmem>>, %arg2: memref<16x32xbf16, #tpu.memory_space<vmem>>, %arg3: memref<1x32xf32, #tpu.memory_space<vmem>>, %arg4: memref<32x32xbf16, #tpu.memory_space<vmem>>, %arg5: memref<1x32xf32, #tpu.memory_space<vmem>>, %arg6: memref<32x8xbf16, #tpu.memory_space<vmem>>, %arg7: memref<1x8xf32, #tpu.memory_space<vmem>>, %arg8: memref<8x8xf32, #tpu.memory_space<vmem>>) attributes {dimension_semantics = [#tpu.dimension_semantics<parallel>], iteration_bounds = array<i64: 1>, scalar_prefetch = 0 : i64, scratch_operands = 0 : i64, tpu.core_type = #tpu.core_type<tc>, window_params = [{transform_indices = @transform_0, window_bounds = array<i64: 8, 16>}, {pipeline_mode = #tpu.pipeline_mode<synchronous>, transform_indices = @transform_1, window_bounds = array<i64: 16, 32>}, {pipeline_mode = #tpu.pipeline_mode<synchronous>, transform_indices = @transform_2, window_bounds = array<i64: 1, 32>}, {pipeline_mode = #tpu.pipeline_mode<synchronous>, transform_indices = @transform_3, window_bounds = array<i64: 32, 32>}, {pipeline_mode = #tpu.pipeline_mode<synchronous>, transform_indices = @transform_4, window_bounds = array<i64: 1, 32>}, {pipeline_mode = #tpu.pipeline_mode<synchronous>, transform_indices = @transform_5, window_bounds = array<i64: 32, 8>}, {pipeline_mode = #tpu.pipeline_mode<synchronous>, transform_indices = @transform_6, window_bounds = array<i64: 1, 8>}, {transform_indices = @transform_7, window_bounds = array<i64: 8, 8>}]} {
    %c0 = arith.constant 0 : index
    %c0_0 = arith.constant 0 : index
    %0 = vector.load %arg1[%c0, %c0_0] : memref<8x16xbf16, #tpu.memory_space<vmem>>, vector<8x16xbf16>
    %c0_1 = arith.constant 0 : index
    %c0_2 = arith.constant 0 : index
    %1 = vector.load %arg2[%c0_1, %c0_2] : memref<16x32xbf16, #tpu.memory_space<vmem>>, vector<16x32xbf16>
    %cst = arith.constant dense<0.000000e+00> : vector<8x32xf32>
    %2 = tpu.matmul %0, %1, %cst {dimension_numbers = #tpu.dot_dimension_numbers<[1], [0], [0], [1], [0, 0, 1, 1], [], []>} : vector<8x16xbf16>, vector<16x32xbf16>, vector<8x32xf32> -> vector<8x32xf32>
    %c0_3 = arith.constant 0 : index
    %c0_4 = arith.constant 0 : index
    %3 = vector.load %arg3[%c0_3, %c0_4] : memref<1x32xf32, #tpu.memory_space<vmem>>, vector<1x32xf32>
    %4 = vector.broadcast %3 : vector<1x32xf32> to vector<8x32xf32>
    %5 = arith.addf %2, %4 : vector<8x32xf32>
    %cst_5 = arith.constant 0.000000e+00 : f32
    %6 = vector.broadcast %cst_5 : f32 to vector<8x32xf32>
    %7 = arith.maximumf %5, %6 : vector<8x32xf32>
    %8 = arith.truncf %7 : vector<8x32xf32> to vector<8x32xbf16>
    %c0_6 = arith.constant 0 : index
    %c0_7 = arith.constant 0 : index
    %9 = vector.load %arg4[%c0_6, %c0_7] : memref<32x32xbf16, #tpu.memory_space<vmem>>, vector<32x32xbf16>
    %cst_8 = arith.constant dense<0.000000e+00> : vector<8x32xf32>
    %10 = tpu.matmul %8, %9, %cst_8 {dimension_numbers = #tpu.dot_dimension_numbers<[1], [0], [0], [1], [0, 0, 1, 1], [], []>} : vector<8x32xbf16>, vector<32x32xbf16>, vector<8x32xf32> -> vector<8x32xf32>
    %c0_9 = arith.constant 0 : index
    %c0_10 = arith.constant 0 : index
    %11 = vector.load %arg5[%c0_9, %c0_10] : memref<1x32xf32, #tpu.memory_space<vmem>>, vector<1x32xf32>
    %12 = vector.broadcast %11 : vector<1x32xf32> to vector<8x32xf32>
    %13 = arith.addf %10, %12 : vector<8x32xf32>
    %cst_11 = arith.constant 0.000000e+00 : f32
    %14 = vector.broadcast %cst_11 : f32 to vector<8x32xf32>
    %15 = arith.maximumf %13, %14 : vector<8x32xf32>
    %16 = arith.truncf %15 : vector<8x32xf32> to vector<8x32xbf16>
    %c0_12 = arith.constant 0 : index
    %c0_13 = arith.constant 0 : index
    %17 = vector.load %arg6[%c0_12, %c0_13] : memref<32x8xbf16, #tpu.memory_space<vmem>>, vector<32x8xbf16>
    %cst_14 = arith.constant dense<0.000000e+00> : vector<8x8xf32>
    %18 = tpu.matmul %16, %17, %cst_14 {dimension_numbers = #tpu.dot_dimension_numbers<[1], [0], [0], [1], [0, 0, 1, 1], [], []>} : vector<8x32xbf16>, vector<32x8xbf16>, vector<8x8xf32> -> vector<8x8xf32>
    %c0_15 = arith.constant 0 : index
    %c0_16 = arith.constant 0 : index
    %19 = vector.load %arg7[%c0_15, %c0_16] : memref<1x8xf32, #tpu.memory_space<vmem>>, vector<1x8xf32>
    %20 = vector.broadcast %19 : vector<1x8xf32> to vector<8x8xf32>
    %21 = arith.addf %18, %20 : vector<8x8xf32>
    %c0_17 = arith.constant 0 : index
    %c0_18 = arith.constant 0 : index
    %22 = vector.load %arg8[%c0_17, %c0_18] : memref<8x8xf32, #tpu.memory_space<vmem>>, vector<8x8xf32>
    tpu.vector_store %arg8[%c0_17, %c0_18], %21 {strides = array<i32>} : memref<8x8xf32, #tpu.memory_space<vmem>>, vector<8x8xf32>,
    return
  }
  func.func @transform_0(%arg0: i32) -> (i32, i32) {
    %c0_i32 = arith.constant 0 : i32
    %c0_i32_0 = arith.constant 0 : i32
    return %arg0, %c0_i32 : i32, i32
  }
  func.func @transform_1(%arg0: i32) -> (i32, i32) {
    %c0_i32 = arith.constant 0 : i32
    %c0_i32_0 = arith.constant 0 : i32
    %c0_i32_1 = arith.constant 0 : i32
    return %c0_i32, %c0_i32_0 : i32, i32
  }
  func.func @transform_2(%arg0: i32) -> (i32, i32) {
    %c0_i32 = arith.constant 0 : i32
    %c0_i32_0 = arith.constant 0 : i32
    %c0_i32_1 = arith.constant 0 : i32
    return %c0_i32, %c0_i32_0 : i32, i32
  }
  func.func @transform_3(%arg0: i32) -> (i32, i32) {
    %c0_i32 = arith.constant 0 : i32
    %c0_i32_0 = arith.constant 0 : i32
    %c0_i32_1 = arith.constant 0 : i32
    return %c0_i32, %c0_i32_0 : i32, i32
  }
  func.func @transform_4(%arg0: i32) -> (i32, i32) {
    %c0_i32 = arith.constant 0 : i32
    %c0_i32_0 = arith.constant 0 : i32
    %c0_i32_1 = arith.constant 0 : i32
    return %c0_i32, %c0_i32_0 : i32, i32
  }
  func.func @transform_5(%arg0: i32) -> (i32, i32) {
    %c0_i32 = arith.constant 0 : i32
    %c0_i32_0 = arith.constant 0 : i32
    %c0_i32_1 = arith.constant 0 : i32
    return %c0_i32, %c0_i32_0 : i32, i32
  }
  func.func @transform_6(%arg0: i32) -> (i32, i32) {
    %c0_i32 = arith.constant 0 : i32
    %c0_i32_0 = arith.constant 0 : i32
    %c0_i32_1 = arith.constant 0 : i32
    return %c0_i32, %c0_i32_0 : i32, i32
  }
  func.func @transform_7(%arg0: i32) -> (i32, i32) {
    %c0_i32 = arith.constant 0 : i32
    %c0_i32_0 = arith.constant 0 : i32
    return %arg0, %c0_i32 : i32, i32
  }
}

</mosaic_0001>

<llo_original>
// kernel: mlp_forward.1
$region0: #{mlp_forward.1}
  #allocation0 [shape = 'u32[]', space=smem, size = 0x4, offset = 0x4, fixed_abs, tag = 'smem constant byte address 0x4 - core index']
  #allocation1 [shape = 'u32[144,128]{1,0:T(1,128)}', space=vmem, size = 0x12000, scoped, tag = 'internal scratch']
  %s0 = inlined_call_operand.hbm [shape: bf16[8,16], index: 0, kind: input, shape index: {}]
  %s1 = inlined_call_operand.vmem [shape: bf16[16,32], index: 1, kind: input, shape index: {}]
  %s2 = inlined_call_operand.vmem [shape: f32[1,32], index: 2, kind: input, shape index: {}]
  %s3 = inlined_call_operand.vmem [shape: bf16[32,32], index: 3, kind: input, shape index: {}]
  %s4 = inlined_call_operand.vmem [shape: f32[1,32], index: 4, kind: input, shape index: {}]
  %s5 = inlined_call_operand.vmem [shape: bf16[32,8], index: 5, kind: input, shape index: {}]
  %s6 = inlined_call_operand.hbm [shape: f32[1,8], index: 6, kind: input, shape index: {}]
  %s7 = inlined_call_operand.hbm [shape: f32[8,8], index: 7, kind: output, shape index: {}]
  %s8 = sld [smem:[#allocation0]]
  $region46: #{mlp_forward.1} parent=0
    _
  %s10 = ssub.s32 1, %s8
  %s11 = scalar_select 0, %s10, %s8
  $region1: #{mlp_forward.1} parent=0
    #allocation2 [shape = 'u8[2048]{0}', space=vmem, size = 0x800, scoped, tag = 'input window, operand 0, single buffered']
    #allocation3 [shape = 's32[1]{0}', space=sflag, size = 0x4, scoped, tag = 'scoped memory for mlp_forward.1']
    #allocation4 [shape = 's32[1]{0}', space=sflag, size = 0x4, scoped, tag = 'scoped memory for mlp_forward.1']
    #allocation5 [shape = 'u8[512]{0}', space=vmem, size = 0x400, scoped, tag = 'input window, operand 6, single buffered']
    #allocation6 [shape = 's32[1]{0}', space=sflag, size = 0x4, scoped, tag = 'scoped memory for mlp_forward.1']
    #allocation7 [shape = 'u8[4096]{0}', space=vmem, size = 0x1000, scoped, tag = 'output window, operand 0, single buffered']
    %12 = vsyncpa [#allocation3], 0
    %13 = vsyncpa [#allocation6], 0
    %14 = vsyncpa [#allocation4], 0
    // Predicated region
    $region2: #{mlp_forward.1} parent=1 // pred_check
      _
    $region3: #{mlp_forward.1} parent=1 // pred_check_branch
      %16 = sbr.rel (0) target = $region5
    $region4: #{mlp_forward.1} parent=1 // pred_region
      %s18 = ssub.s32 64, 64
      %19 = vsyncadd [#allocation3], %s18
      %s21 = sshll.u32 [#allocation2], 4
      %s22 = int_to_ptr.vmem [resolvable:$true] %s21
      %24 = dma.hbm_to_vmem [thread:$0]  %s0, 64, %s22, [#allocation3]
    $region5: #{mlp_forward.1} parent=1 // pred_fallthru
      _
    // Predicated region
    $region6: #{mlp_forward.1} parent=1 // pred_check
      _
    $region7: #{mlp_forward.1} parent=1 // pred_check_branch
      %26 = sbr.rel (0) target = $region9
    $region8: #{mlp_forward.1} parent=1 // pred_region
      _
    $region9: #{mlp_forward.1} parent=1 // pred_fallthru
      _
    // Predicated region
    $region10: #{mlp_forward.1} parent=1 // pred_check
      _
    $region11: #{mlp_forward.1} parent=1 // pred_check_branch
      %28 = sbr.rel (0) target = $region13
    $region12: #{mlp_forward.1} parent=1 // pred_region
      _
    $region13: #{mlp_forward.1} parent=1 // pred_fallthru
      _
    // Predicated region
    $region14: #{mlp_forward.1} parent=1 // pred_check
      _
    $region15: #{mlp_forward.1} parent=1 // pred_check_branch
      %30 = sbr.rel (0) target = $region17
    $region16: #{mlp_forward.1} parent=1 // pred_region
      _
    $region17: #{mlp_forward.1} parent=1 // pred_fallthru
      _
    // Predicated region
    $region18: #{mlp_forward.1} parent=1 // pred_check
      _
    $region19: #{mlp_forward.1} parent=1 // pred_check_branch
      %32 = sbr.rel (0) target = $region21
    $region20: #{mlp_forward.1} parent=1 // pred_region
      _
    $region21: #{mlp_forward.1} parent=1 // pred_fallthru
      _
    // Predicated region
    $region22: #{mlp_forward.1} parent=1 // pred_check
      _
    $region23: #{mlp_forward.1} parent=1 // pred_check_branch
      %34 = sbr.rel (0) target = $region25
    $region24: #{mlp_forward.1} parent=1 // pred_region
      _
    $region25: #{mlp_forward.1} parent=1 // pred_fallthru
      _
    // Predicated region
    $region26: #{mlp_forward.1} parent=1 // pred_check
      _
    $region27: #{mlp_forward.1} parent=1 // pred_check_branch
      %36 = sbr.rel (0) target = $region29
    $region28: #{mlp_forward.1} parent=1 // pred_region
      %s38 = ssub.s32 16, 16
      %39 = vsyncadd [#allocation6], %s38
      %s41 = sshll.u32 [#allocation5], 4
      %s42 = int_to_ptr.vmem [resolvable:$true] %s41
      %44 = dma.hbm_to_vmem [thread:$0]  %s6, 16, %s42, [#allocation6]
    $region29: #{mlp_forward.1} parent=1 // pred_fallthru
      _
    // Predicated region
    $region30: #{mlp_forward.1} parent=1 // pred_check
      _
    $region31: #{mlp_forward.1} parent=1 // pred_check_branch
      %46 = sbr.rel (0) target = $region33
    $region32: #{mlp_forward.1} parent=1 // pred_region
      %47 = dma.done [#allocation3], 64
    $region33: #{mlp_forward.1} parent=1 // pred_fallthru
      _
    // Predicated region
    $region34: #{mlp_forward.1} parent=1 // pred_check
      _
    $region35: #{mlp_forward.1} parent=1 // pred_check_branch
      %49 = sbr.rel (0) target = $region37
    $region36: #{mlp_forward.1} parent=1 // pred_region
      %50 = dma.done [#allocation6], 16
    $region37: #{mlp_forward.1} parent=1 // pred_fallthru
      _
    %v52 = vld [vmem:[#allocation2] sm:$0xf]
    %v53 = vld [vmem:[%s1] sm:$0xf]
    %v54 = vld [vmem:[%s1 + $0x4] sm:$0xf]
    %v55 = vld [vmem:[%s2] sm:$0x1]
    %v57 = vlaneseq
    %v58 = vshrl.u32 %v57, 7
    %v59 = vsub.s32 0, %v58
    %v60 = vrot.slane %v55, %v59
    %v64 = vunpack.c.l.b16 %v53
    %v65 = vunpack.c.l.b16 %v54
    %v66 = vpack.c.b16 %v65, %v64
    %vm68 = vcmask 130048
    %v70 = vsel %vm68, %v52, 0
    %72 = vmatprep.subr.bf16.mxu0 0
    %73 = vmatpush1.bf16.msra.mxu0 0
    %74 = vmatprep.subr.bf16.mxu0 0
    %75 = vmatpush1.bf16.msra.mxu0 0
    %76 = vmatprep.subr.bf16.mxu0 0
    %77 = vmatpush1.bf16.msra.mxu0 0
    %78 = vmatprep.subr.bf16.mxu0 0
    %79 = vmatpush1.bf16.msra.mxu0 0
    %80 = vmatprep.subr.bf16.mxu0 0
    %81 = vmatpush1.bf16.msra.mxu0 0
    %82 = vmatprep.subr.bf16.mxu0 0
    %83 = vmatpush1.bf16.msra.mxu0 0
    %84 = vmatprep.subr.bf16.mxu0 0
    %85 = vmatpush1.bf16.msra.mxu0 0
    %86 = vmatprep.subr.bf16.mxu0 0
    %87 = vmatpush1.bf16.msra.mxu0 %v66
    %88 = vmatprep.subr.bf16.mxu0 0
    %89 = vmatpush2.bf16.msra.mxu0 0
    %90 = vmatprep.subr.bf16.mxu0 0
    %91 = vmatpush2.bf16.msra.mxu0 0
    %92 = vmatprep.subr.bf16.mxu0 0
    %93 = vmatpush2.bf16.msra.mxu0 0
    %94 = vmatprep.subr.bf16.mxu0 0
    %95 = vmatpush2.bf16.msra.mxu0 0
    %96 = vmatprep.subr.bf16.mxu0 0
    %97 = vmatpush2.bf16.msra.mxu0 0
    %98 = vmatprep.subr.bf16.mxu0 0
    %99 = vmatpush2.bf16.msra.mxu0 0
    %100 = vmatprep.subr.bf16.mxu0 0
    %101 = vmatpush2.bf16.msra.mxu0 0
    %102 = vmatprep.subr.bf16.mxu0 0
    %103 = vmatpush2.bf16.msra.mxu0 0
    %104 = vmatprep.mubr.bf16.mxu0 0
    %105 = vmatmul.mubr.bf16.gmra.mxu0 %v70
    %v106 = vpop.f32.mrf.mxu0
    %v107 = vadd.f32 %v60, %v106
    %v108 = vpop.f32.mrf.mxu0
    %v109 = vpop.f32.mrf.mxu0
    %v110 = vpop.f32.mrf.mxu0
    %111 = vdwg.mxu0
    %v112 = vmax.f32 %v107, 0.0
    %v113 = vpack.c.bf16 %v112, %v112
    %v114 = vld [vmem:[%s3] sm:$0xf]
    %v115 = vld [vmem:[%s3 + $0x4] sm:$0xf]
    %v116 = vld [vmem:[%s3 + $0x8] sm:$0xf]
    %v117 = vld [vmem:[%s3 + $0xc] sm:$0xf]
    %v118 = vld [vmem:[%s4] sm:$0x1]
    %v120 = vlaneseq
    %v121 = vshrl.u32 %v120, 7
    %v122 = vsub.s32 0, %v121
    %v123 = vrot.slane %v118, %v122
    %v129 = vunpack.c.l.b16 %v114
    %v130 = vunpack.c.l.b16 %v115
    %v131 = vunpack.c.l.b16 %v116
    %v132 = vunpack.c.l.b16 %v117
    %v133 = vpack.c.b16 %v130, %v129
    %v134 = vpack.c.b16 %v132, %v131
    %vm137 = vcmask 261120
    %v139 = vsel %vm137, %v113, 0
    %141 = vmatprep.subr.bf16.mxu0 0
    %142 = vmatpush1.bf16.msra.mxu0 0
    %143 = vmatprep.subr.bf16.mxu0 0
    %144 = vmatpush1.bf16.msra.mxu0 0
    %145 = vmatprep.subr.bf16.mxu0 0
    %146 = vmatpush1.bf16.msra.mxu0 0
    %147 = vmatprep.subr.bf16.mxu0 0
    %148 = vmatpush1.bf16.msra.mxu0 0
    %149 = vmatprep.subr.bf16.mxu0 0
    %150 = vmatpush1.bf16.msra.mxu0 0
    %151 = vmatprep.subr.bf16.mxu0 0
    %152 = vmatpush1.bf16.msra.mxu0 0
    %153 = vmatprep.subr.bf16.mxu0 0
    %154 = vmatpush1.bf16.msra.mxu0 %v134
    %155 = vmatprep.subr.bf16.mxu0 0
    %156 = vmatpush1.bf16.msra.mxu0 %v133
    %157 = vmatprep.subr.bf16.mxu0 0
    %158 = vmatpush2.bf16.msra.mxu0 0
    %159 = vmatprep.subr.bf16.mxu0 0
    %160 = vmatpush2.bf16.msra.mxu0 0
    %161 = vmatprep.subr.bf16.mxu0 0
    %162 = vmatpush2.bf16.msra.mxu0 0
    %163 = vmatprep.subr.bf16.mxu0 0
    %164 = vmatpush2.bf16.msra.mxu0 0
    %165 = vmatprep.subr.bf16.mxu0 0
    %166 = vmatpush2.bf16.msra.mxu0 0
    %167 = vmatprep.subr.bf16.mxu0 0
    %168 = vmatpush2.bf16.msra.mxu0 0
    %169 = vmatprep.subr.bf16.mxu0 0
    %170 = vmatpush2.bf16.msra.mxu0 0
    %171 = vmatprep.subr.bf16.mxu0 0
    %172 = vmatpush2.bf16.msra.mxu0 0
    %173 = vmatprep.mubr.bf16.mxu0 0
    %174 = vmatmul.mubr.bf16.gmra.mxu0 %v139
    %v175 = vpop.f32.mrf.mxu0
    %v176 = vadd.f32 %v123, %v175
    %v177 = vpop.f32.mrf.mxu0
    %v178 = vpop.f32.mrf.mxu0
    %v179 = vpop.f32.mrf.mxu0
    %180 = vdwg.mxu0
    %v181 = vmax.f32 %v176, 0.0
    %v182 = vpack.c.bf16 %v181, %v181
    %v183 = vld [vmem:[%s5] sm:$0xf]
    %v184 = vld [vmem:[%s5 + $0x4] sm:$0xf]
    %v185 = vld [vmem:[%s5 + $0x8] sm:$0xf]
    %v186 = vld [vmem:[%s5 + $0xc] sm:$0xf]
    %v187 = vld [vmem:[#allocation5] sm:$0x1]
    %v189 = vlaneseq
    %v190 = vshrl.u32 %v189, 7
    %v191 = vsub.s32 0, %v190
    %v192 = vrot.slane %v187, %v191
    %v198 = vunpack.c.l.b16 %v183
    %v199 = vunpack.c.l.b16 %v184
    %v200 = vunpack.c.l.b16 %v185
    %v201 = vunpack.c.l.b16 %v186
    %v202 = vpack.c.b16 %v199, %v198
    %v203 = vpack.c.b16 %v201, %v200
    %v207 = vsel %vm137, %v182, 0
    %209 = vmatprep.subr.bf16.mxu0 0
    %210 = vmatpush1.bf16.msra.mxu0 0
    %211 = vmatprep.subr.bf16.mxu0 0
    %212 = vmatpush1.bf16.msra.mxu0 0
    %213 = vmatprep.subr.bf16.mxu0 0
    %214 = vmatpush1.bf16.msra.mxu0 0
    %215 = vmatprep.subr.bf16.mxu0 0
    %216 = vmatpush1.bf16.msra.mxu0 0
    %217 = vmatprep.subr.bf16.mxu0 0
    %218 = vmatpush1.bf16.msra.mxu0 0
    %219 = vmatprep.subr.bf16.mxu0 0
    %220 = vmatpush1.bf16.msra.mxu0 0
    %221 = vmatprep.subr.bf16.mxu0 0
    %222 = vmatpush1.bf16.msra.mxu0 %v203
    %223 = vmatprep.subr.bf16.mxu0 0
    %224 = vmatpush1.bf16.msra.mxu0 %v202
    %225 = vmatprep.subr.bf16.mxu0 0
    %226 = vmatpush2.bf16.msra.mxu0 0
    %227 = vmatprep.subr.bf16.mxu0 0
    %228 = vmatpush2.bf16.msra.mxu0 0
    %229 = vmatprep.subr.bf16.mxu0 0
    %230 = vmatpush2.bf16.msra.mxu0 0
    %231 = vmatprep.subr.bf16.mxu0 0
    %232 = vmatpush2.bf16.msra.mxu0 0
    %233 = vmatprep.subr.bf16.mxu0 0
    %234 = vmatpush2.bf16.msra.mxu0 0
    %235 = vmatprep.subr.bf16.mxu0 0
    %236 = vmatpush2.bf16.msra.mxu0 0
    %237 = vmatprep.subr.bf16.mxu0 0
    %238 = vmatpush2.bf16.msra.mxu0 0
    %239 = vmatprep.subr.bf16.mxu0 0
    %240 = vmatpush2.bf16.msra.mxu0 0
    %241 = vmatprep.mubr.bf16.mxu0 0
    %242 = vmatmul.mubr.bf16.gmra.mxu0 %v207
    %v243 = vpop.f32.mrf.mxu0
    %v244 = vadd.f32 %v192, %v243
    %v245 = vpop.f32.mrf.mxu0
    %v246 = vpop.f32.mrf.mxu0
    %v247 = vpop.f32.mrf.mxu0
    %248 = vdwg.mxu0
    %vm249 = vcmask 64512
    %250 = vst.msk [vmem:[#allocation7] sm:$0xff] %vm249, %v244
    // Predicated region
    $region38: #{mlp_forward.1} parent=1 // pred_check
      _
    $region39: #{mlp_forward.1} parent=1 // pred_check_branch
      %252 = sbr.rel (0) target = $region41
    $region40: #{mlp_forward.1} parent=1 // pred_region
      %s254 = ssub.s32 128, 128
      %255 = vsyncadd [#allocation4], %s254
      %s257 = sshll.u32 [#allocation7], 4
      %s258 = int_to_ptr.vmem [resolvable:$true] %s257
      %260 = dma.vmem_to_hbm [thread:$0]  %s258, 128, %s7, [#allocation4]
    $region41: #{mlp_forward.1} parent=1 // pred_fallthru
      _
    // Predicated region
    $region42: #{mlp_forward.1} parent=1 // pred_check
      _
    $region43: #{mlp_forward.1} parent=1 // pred_check_branch
      %262 = sbr.rel (0) target = $region45
    $region44: #{mlp_forward.1} parent=1 // pred_region
      %263 = dma.done [#allocation4], 128
    $region45: #{mlp_forward.1} parent=1 // pred_fallthru
      _
    %264 = vsyncpa [#allocation3], 1
    %265 = vsyncpa [#allocation6], 1
    %266 = vsyncpa [#allocation4], 1

</llo_original>
